<compile_context>
chip_gen: v7x
topology: tpu7x:2x2x1
jax: 0.10.0
libtpu: 0.0.40
codegen_flags: <defaults>
</compile_context>

<pallas_src>
import jax
import jax.numpy as jnp
from jax.experimental import pallas as pl
from jax.experimental.pallas import tpu as pltpu

SMOOTH = 1.0


def dice_kernel(p_ref, t_ref, inter_ref, pt_ref):
    """Accumulate lane-vector partial sums for one parallel block.

    p_ref / t_ref    : (bn, br, L) channel-0 tile in the original input dtype
                       (channel dim squeezed out by the BlockSpec).
    inter_ref, pt_ref: (1, 1, L) f32 accumulators.  Their block index depends
                       only on the parallel grid axis, so they stay resident
                       in VMEM across the sequential (arbitrary) axis.
    Per step: cast, multiply, and leading-axis/sublane reductions only (VPU
    adds + one sublane reduce per sum); no per-step cross-lane scalar reduce.
    """
    j = pl.program_id(1)

    @pl.when(j == 0)
    def _():
        inter_ref[...] = jnp.zeros_like(inter_ref)
        pt_ref[...] = jnp.zeros_like(pt_ref)

    p = p_ref[...].astype(jnp.float32)
    t = t_ref[...].astype(jnp.float32)

    inter_ref[...] += jnp.sum(p * t, axis=(0, 1), keepdims=True)
    # Separate sums: same add count as sum(p + t) but no full-tile temporary.
    pt_ref[...] += (jnp.sum(p, axis=(0, 1), keepdims=True)
                    + jnp.sum(t, axis=(0, 1), keepdims=True))


def _divisors(n):
    return [d for d in range(1, n + 1) if n % d == 0]


def _vmem_budgets():
    """(vmem_limit_bytes, per-input per-step block-byte budget), per chip gen."""
    try:
        phys = pltpu.get_tpu_info().vmem_capacity_bytes
    except Exception:
        phys = None
    if phys is not None and phys > 96 * 1024 * 1024:
        # v5e / v6e class: 128 MiB physical VMEM -> big steps amortize the
        # ~0.35us per-step pipeline overhead; 2 inputs x 2 bufs x 10 MiB = 40 MiB.
        return 64 * 1024 * 1024, 10 * 1024 * 1024
    # v7x class (64 MiB physical) or unknown: 2 x 2 x 6 MiB = 24 MiB <= 32 MiB.
    return 32 * 1024 * 1024, 6 * 1024 * 1024


def _plan_blocks(N, R, lanes, sub, itemsize, block_bytes):
    """Choose (bn, br, n_parallel, GP, GS) for grid (GP=parallel, GS=arbitrary).

    Prefers >= 2 blocks on the parallel axis (keeps both v7x TensorCores
    streaming HBM).  When N == 1 the R-block axis is split into GP chunks.
    """
    row_bytes = lanes * itemsize
    # br: divisor of R that is a multiple of the sublane tile, or R itself.
    br_cands = sorted({d for d in _divisors(R) if d % sub == 0} | {R})
    br_fit = [d for d in br_cands if d * row_bytes <= block_bytes]
    br = max(br_fit) if br_fit else min(br_cands)

    bn_cands = [d for d in _divisors(N) if d * br * row_bytes <= block_bytes]
    if N >= 2:
        bn_cands = [d for d in bn_cands if d <= N // 2]   # force >= 2 N-blocks
    bn = max(bn_cands) if bn_cands else 1

    gn, gr = N // bn, R // br
    if gn >= 2 or gr == 1:
        return bn, br, True, gn, gr
    # Single N-block: split the R-block axis across the parallel dimension.
    gp_cands = [d for d in _divisors(gr) if d >= 2]
    gp = min(gp_cands) if gp_cands else 1
    return bn, br, False, gp, gr // gp


def dice_loss(y_pred, y_true, *, max_block_bytes=None):
    """1 - DSC, matching DiceLoss.forward semantics exactly (channel 0 only)."""
    assert y_pred.shape == y_true.shape
    N, C, H, W = y_pred.shape
    F = H * W

    vmem_limit, default_block = _vmem_budgets()
    block_bytes = default_block if max_block_bytes is None else max_block_bytes

    # Lane-dense view: merge (H, W) and re-split into rows of 128 lanes (free
    # metadata reshape).  Fall back to native (H, W) tiling when F % 128 != 0.
    if F % 128 == 0:
        R, L = F // 128, 128
        yp = y_pred.reshape(N, C, R, L)
        yt = y_true.reshape(N, C, R, L)
    else:
        R, L = H, W
        yp, yt = y_pred, y_true

    itemsize_p = jnp.dtype(y_pred.dtype).itemsize
    itemsize_t = jnp.dtype(y_true.dtype).itemsize
    itemsize = max(itemsize_p, itemsize_t)
    sub = max(8, 32 // max(1, min(itemsize_p, itemsize_t)))  # sublane tile

    bn, br, n_parallel, GP, GS = _plan_blocks(N, R, L, sub, itemsize, block_bytes)

    if n_parallel:
        def in_map(i, j):                      # parallel axis = N-blocks
            return (i, 0, j, 0)
    else:
        def in_map(i, j):                      # parallel axis = R-block chunks
            return (0, 0, i * GS + j, 0)

    in_spec = pl.BlockSpec((bn, None, br, L), in_map)
    out_spec = pl.BlockSpec((1, 1, L), lambda i, j: (i, 0, 0))

    total = N * F  # channel-0 elements read per input
    cost = pl.CostEstimate(
        flops=3 * total,
        bytes_accessed=total * (itemsize_p + itemsize_t),
        transcendentals=0,
    )

    inter_p, pt_p = pl.pallas_call(
        dice_kernel,
        out_shape=(
            jax.ShapeDtypeStruct((GP, 1, L), jnp.float32),
            jax.ShapeDtypeStruct((GP, 1, L), jnp.float32),
        ),
        grid_spec=pltpu.PrefetchScalarGridSpec(
            num_scalar_prefetch=0,
            grid=(GP, GS),
            in_specs=[in_spec, in_spec],
            out_specs=[out_spec, out_spec],
        ),
        compiler_params=pltpu.CompilerParams(
            dimension_semantics=("parallel", "arbitrary"),
            vmem_limit_bytes=vmem_limit,
        ),
        cost_estimate=cost,
    )(yp, yt)

    # Collapse the tiny lane-vector partials and finalize in plain JAX.
    intersection = jnp.sum(inter_p)
    denom = jnp.sum(pt_p)
    dsc = (2.0 * intersection + SMOOTH) / (denom + SMOOTH)
    return 1.0 - dsc


def dice_loss_ref(y_pred, y_true):
    """Pure-JAX reference mirroring the PyTorch forward."""
    p = y_pred[:, 0].reshape(-1).astype(jnp.float32)
    t = y_true[:, 0].reshape(-1).astype(jnp.float32)
    inter = jnp.sum(p * t)
    dsc = (2.0 * inter + SMOOTH) / (jnp.sum(p) + jnp.sum(t) + SMOOTH)
    return 1.0 - dsc


if __name__ == "__main__":
    key = jax.random.PRNGKey(0)
    k1, k2 = jax.random.split(key)

    # Primary small shape consistent with the UNet segmentation use-case.
    shape = (2, 4, 16, 16)
    y_pred = jax.random.uniform(k1, shape, dtype=jnp.float32)            # probs
    y_true = (jax.random.uniform(k2, shape) > 0.5).astype(jnp.float32)   # mask

    ref = jax.block_until_ready(dice_loss_ref(y_pred, y_true))
    loss = jax.block_until_ready(dice_loss(y_pred, y_true))
    assert jnp.allclose(loss, ref, rtol=1e-5, atol=1e-6), (loss, ref)

    # bf16 inputs go straight into the kernel; accumulation stays f32.
    yp16, yt16 = y_pred.astype(jnp.bfloat16), y_true.astype(jnp.bfloat16)
    l16 = jax.block_until_ready(dice_loss(yp16, yt16))
    r16 = jax.block_until_ready(dice_loss_ref(yp16, yt16))
    assert jnp.allclose(l16, r16, rtol=1e-4, atol=1e-5), (l16, r16)

    # Multi-step sequential axis (exercises init at j==0 + accumulation).
    k3, k4 = jax.random.split(k1)
    shape2 = (2, 2, 32, 64)   # F = 2048 -> R = 16
    p2 = jax.random.uniform(k3, shape2, dtype=jnp.float32)
    t2 = (jax.random.uniform(k4, shape2) > 0.5).astype(jnp.float32)
    l2 = jax.block_until_ready(dice_loss(p2, t2, max_block_bytes=4096))
    r2 = jax.block_until_ready(dice_loss_ref(p2, t2))
    assert jnp.allclose(l2, r2, rtol=1e-5, atol=1e-6), (l2, r2)

    # N == 1: reduction-axis blocks split across the parallel grid axis.
    p3, t3 = p2[:1], t2[:1]
    l3 = jax.block_until_ready(dice_loss(p3, t3, max_block_bytes=4096))
    r3 = jax.block_until_ready(dice_loss_ref(p3, t3))
    assert jnp.allclose(l3, r3, rtol=1e-5, atol=1e-6), (l3, r3)

    # H*W not a multiple of 128 -> native (H, W) fallback tiling.
    k5, k6 = jax.random.split(k2)
    shape3 = (2, 3, 10, 12)
    p4 = jax.random.uniform(k5, shape3, dtype=jnp.float32)
    t4 = (jax.random.uniform(k6, shape3) > 0.5).astype(jnp.float32)
    l4 = jax.block_until_ready(dice_loss(p4, t4))
    r4 = jax.block_until_ready(dice_loss_ref(p4, t4))
    assert jnp.allclose(l4, r4, rtol=1e-5, atol=1e-6), (l4, r4)

    print("KERNEL_OK")
</pallas_src>

<mosaic_0001>
module attributes {stable_mosaic.version = 11 : i64} {
  func.func @dice_kernel(%arg0: i32, %arg1: i32, %arg2: memref<1x1x2x128xf32, #tpu.memory_space<vmem>>, %arg3: memref<1x1x2x128xf32, #tpu.memory_space<vmem>>, %arg4: memref<1x1x128xf32, #tpu.memory_space<vmem>>, %arg5: memref<1x1x128xf32, #tpu.memory_space<vmem>>) attributes {dimension_semantics = [#tpu.dimension_semantics<parallel>, #tpu.dimension_semantics<arbitrary>], iteration_bounds = array<i64: 2, 1>, scalar_prefetch = 0 : i64, scratch_operands = 0 : i64, tpu.core_type = #tpu.core_type<tc>, window_params = [{transform_indices = @transform_0, window_bounds = array<i64: 1, 1, 2, 128>}, {transform_indices = @transform_1, window_bounds = array<i64: 1, 1, 2, 128>}, {transform_indices = @transform_2, window_bounds = array<i64: 1, 1, 128>}, {transform_indices = @transform_3, window_bounds = array<i64: 1, 1, 128>}]} {
    %c0_i32 = arith.constant 0 : i32
    %0 = arith.cmpi eq, %arg1, %c0_i32 : i32
    %1 = arith.extui %0 : i1 to i32
    %c0_i32_0 = arith.constant 0 : i32
    %2 = arith.cmpi ne, %1, %c0_i32_0 : i32
    scf.if %2 {
      %cst_22 = arith.constant 0.000000e+00 : f32
      %21 = vector.broadcast %cst_22 : f32 to vector<1x1x128xf32>
      %c0_23 = arith.constant 0 : index
      %c0_24 = arith.constant 0 : index
      %c0_25 = arith.constant 0 : index
      %22 = vector.load %arg4[%c0_23, %c0_24, %c0_25] : memref<1x1x128xf32, #tpu.memory_space<vmem>>, vector<1x1x128xf32>
      tpu.vector_store %arg4[%c0_23, %c0_24, %c0_25], %21 {strides = array<i32>} : memref<1x1x128xf32, #tpu.memory_space<vmem>>, vector<1x1x128xf32>,
      %cst_26 = arith.constant 0.000000e+00 : f32
      %23 = vector.broadcast %cst_26 : f32 to vector<1x1x128xf32>
      %c0_27 = arith.constant 0 : index
      %c0_28 = arith.constant 0 : index
      %c0_29 = arith.constant 0 : index
      %24 = vector.load %arg5[%c0_27, %c0_28, %c0_29] : memref<1x1x128xf32, #tpu.memory_space<vmem>>, vector<1x1x128xf32>
      tpu.vector_store %arg5[%c0_27, %c0_28, %c0_29], %23 {strides = array<i32>} : memref<1x1x128xf32, #tpu.memory_space<vmem>>, vector<1x1x128xf32>,
    } else {
    }
    %c0 = arith.constant 0 : index
    %c0_1 = arith.constant 0 : index
    %c0_2 = arith.constant 0 : index
    %c0_3 = arith.constant 0 : index
    %3 = vector.load %arg2[%c0, %c0_1, %c0_2, %c0_3] : memref<1x1x2x128xf32, #tpu.memory_space<vmem>>, vector<1x1x2x128xf32>
    %4 = vector.shape_cast %3 : vector<1x1x2x128xf32> to vector<1x2x128xf32>
    %c0_4 = arith.constant 0 : index
    %c0_5 = arith.constant 0 : index
    %c0_6 = arith.constant 0 : index
    %c0_7 = arith.constant 0 : index
    %5 = vector.load %arg3[%c0_4, %c0_5, %c0_6, %c0_7] : memref<1x1x2x128xf32, #tpu.memory_space<vmem>>, vector<1x1x2x128xf32>
    %6 = vector.shape_cast %5 : vector<1x1x2x128xf32> to vector<1x2x128xf32>
    %c0_8 = arith.constant 0 : index
    %c0_9 = arith.constant 0 : index
    %c0_10 = arith.constant 0 : index
    %7 = vector.load %arg4[%c0_8, %c0_9, %c0_10] : memref<1x1x128xf32, #tpu.memory_space<vmem>>, vector<1x1x128xf32>
    %8 = arith.mulf %4, %6 : vector<1x2x128xf32>
    %cst = arith.constant dense<0.000000e+00> : vector<128xf32>
    %9 = vector.multi_reduction <add>, %8, %cst [0, 1] : vector<1x2x128xf32> to vector<128xf32>
    %10 = vector.shape_cast %9 : vector<128xf32> to vector<1x1x128xf32>
    %11 = arith.addf %7, %10 : vector<1x1x128xf32>
    %c0_11 = arith.constant 0 : index
    %c0_12 = arith.constant 0 : index
    %c0_13 = arith.constant 0 : index
    %12 = vector.load %arg4[%c0_11, %c0_12, %c0_13] : memref<1x1x128xf32, #tpu.memory_space<vmem>>, vector<1x1x128xf32>
    tpu.vector_store %arg4[%c0_11, %c0_12, %c0_13], %11 {strides = array<i32>} : memref<1x1x128xf32, #tpu.memory_space<vmem>>, vector<1x1x128xf32>,
    %c0_14 = arith.constant 0 : index
    %c0_15 = arith.constant 0 : index
    %c0_16 = arith.constant 0 : index
    %13 = vector.load %arg5[%c0_14, %c0_15, %c0_16] : memref<1x1x128xf32, #tpu.memory_space<vmem>>, vector<1x1x128xf32>
    %cst_17 = arith.constant dense<0.000000e+00> : vector<128xf32>
    %14 = vector.multi_reduction <add>, %4, %cst_17 [0, 1] : vector<1x2x128xf32> to vector<128xf32>
    %15 = vector.shape_cast %14 : vector<128xf32> to vector<1x1x128xf32>
    %cst_18 = arith.constant dense<0.000000e+00> : vector<128xf32>
    %16 = vector.multi_reduction <add>, %6, %cst_18 [0, 1] : vector<1x2x128xf32> to vector<128xf32>
    %17 = vector.shape_cast %16 : vector<128xf32> to vector<1x1x128xf32>
    %18 = arith.addf %15, %17 : vector<1x1x128xf32>
    %19 = arith.addf %13, %18 : vector<1x1x128xf32>
    %c0_19 = arith.constant 0 : index
    %c0_20 = arith.constant 0 : index
    %c0_21 = arith.constant 0 : index
    %20 = vector.load %arg5[%c0_19, %c0_20, %c0_21] : memref<1x1x128xf32, #tpu.memory_space<vmem>>, vector<1x1x128xf32>
    tpu.vector_store %arg5[%c0_19, %c0_20, %c0_21], %19 {strides = array<i32>} : memref<1x1x128xf32, #tpu.memory_space<vmem>>, vector<1x1x128xf32>,
    return
  }
  func.func @transform_0(%arg0: i32, %arg1: i32) -> (i32, i32, i32, i32) {
    %c0_i32 = arith.constant 0 : i32
    %c0_i32_0 = arith.constant 0 : i32
    %c0_i32_1 = arith.constant 0 : i32
    return %arg0, %c0_i32, %arg1, %c0_i32_0 : i32, i32, i32, i32
  }
  func.func @transform_1(%arg0: i32, %arg1: i32) -> (i32, i32, i32, i32) {
    %c0_i32 = arith.constant 0 : i32
    %c0_i32_0 = arith.constant 0 : i32
    %c0_i32_1 = arith.constant 0 : i32
    return %arg0, %c0_i32, %arg1, %c0_i32_0 : i32, i32, i32, i32
  }
  func.func @transform_2(%arg0: i32, %arg1: i32) -> (i32, i32, i32) {
    %c0_i32 = arith.constant 0 : i32
    %c0_i32_0 = arith.constant 0 : i32
    %c0_i32_1 = arith.constant 0 : i32
    return %arg0, %c0_i32, %c0_i32_0 : i32, i32, i32
  }
  func.func @transform_3(%arg0: i32, %arg1: i32) -> (i32, i32, i32) {
    %c0_i32 = arith.constant 0 : i32
    %c0_i32_0 = arith.constant 0 : i32
    %c0_i32_1 = arith.constant 0 : i32
    return %arg0, %c0_i32, %c0_i32_0 : i32, i32, i32
  }
}

</mosaic_0001>

<llo_original>
// kernel: tpu_custom_call.1
$region0: #{tpu_custom_call.1}
  #allocation0 [shape = 'u32[]', space=smem, size = 0x4, offset = 0x4, fixed_abs, tag = 'smem constant byte address 0x4 - core index']
  #allocation1 [shape = 'u32[144,128]{1,0:T(1,128)}', space=vmem, size = 0x12000, scoped, tag = 'internal scratch']
  %s0 = inlined_call_operand.hbm [shape: f32[2,4,2,128], index: 0, kind: input, shape index: {}]
  %s1 = inlined_call_operand.hbm [shape: f32[2,4,2,128], index: 1, kind: input, shape index: {}]
  %s2 = inlined_call_operand.hbm [shape: f32[2,1,128], index: 2, kind: output, shape index: {0}]
  %s3 = inlined_call_operand.hbm [shape: f32[2,1,128], index: 3, kind: output, shape index: {1}]
  %4 = xla_tuple %s2, %s3
  %s5 = sld [smem:[#allocation0]]
  $region61: #{tpu_custom_call.1} parent=0
    _
  %s7 = ssub.s32 1, %s5
  %s8 = scalar_select 0, %s7, %s5
  $region1: #{tpu_custom_call.1} parent=0
    #allocation2 [shape = 'u8[2048]{0}', space=vmem, size = 0x800, scoped, tag = 'input window, operand 0']
    #allocation3 [shape = 's32[2]{0}', space=sflag, size = 0x8, scoped, tag = 'scoped memory for tpu_custom_call.1']
    #allocation4 [shape = 's32[2]{0}', space=sflag, size = 0x8, scoped, tag = 'scoped memory for tpu_custom_call.1']
    #allocation5 [shape = 'u8[2048]{0}', space=vmem, size = 0x800, scoped, tag = 'input window, operand 1']
    #allocation6 [shape = 's32[2]{0}', space=sflag, size = 0x8, scoped, tag = 'scoped memory for tpu_custom_call.1']
    #allocation7 [shape = 'u8[1024]{0}', space=vmem, size = 0x400, scoped, tag = 'output window, operand 0']
    #allocation8 [shape = 'u8[1024]{0}', space=vmem, size = 0x400, scoped, tag = 'output window, operand 1']
    #allocation9 [shape = 's32[2]{0}', space=sflag, size = 0x8, scoped, tag = 'scoped memory for tpu_custom_call.1']
    %9 = vsyncpa [#allocation3], 0
    %s10 = scalar_lea.sflag [#allocation3], 1
    %11 = vsyncpa %s10, 0
    %12 = vsyncpa [#allocation6], 0
    %s13 = scalar_lea.sflag [#allocation6], 1
    %14 = vsyncpa %s13, 0
    %15 = vsyncpa [#allocation4], 0
    %s16 = scalar_lea.sflag [#allocation4], 1
    %17 = vsyncpa %s16, 0
    %18 = vsyncpa [#allocation9], 0
    %s19 = scalar_lea.sflag [#allocation9], 1
    %20 = vsyncpa %s19, 0
    loop: start=0, step=1, limit=4
    $region2: #{tpu_custom_call.1} parent=1 // loop_pre_header
      _
    $region3: #{tpu_custom_call.1} parent=1 // loop_header
      %s22 = sphi 0, %s26
      %p23 = scmp.ge.s32.totalorder %s22, 4
      %s29 = sphi 0, %s41
      %s30 = sphi 0, %s37
      %s31 = sphi 0, %s29
      %s32 = sphi 0, %s30
      %s33 = sphi 0, %s31
      %s34 = sphi 0, %s32
      %s46 = sphi 0, %s48
      %s49 = sphi 0, %s46
      %s50 = sphi 0, %s49
      %s66 = sphi 0, %s50
      %s74 = sphi 0, %s76
      %s77 = sphi 0, %s74
      %s78 = sphi 0, %s77
      %s94 = sphi 0, %s78
      %s100 = sphi 0, %s102
      %s103 = sphi 0, %s100
      %s104 = sphi 0, %s103
      %s120 = sphi 0, %s104
      %s126 = sphi 0, %s128
      %s129 = sphi 0, %s126
      %s130 = sphi 0, %s129
      %s146 = sphi 0, %s130
    $region4: #{tpu_custom_call.1} parent=1 // loop_header_branch
      %25 = sbr.rel (%p23) target = $region8
    $region5: #{tpu_custom_call.1} parent=1 // loop_body
      %s27 = ssub.s32 %s22, 1
      %s28 = ssub.s32 %s22, 2
      %s35 = sadd.s32 1, %s30
      %p36 = scmp.ge.s32.totalorder %s35, 1
      %s37 = scalar_select %p36, 0, %s35
      %s38 = sadd.s32 1, %s29
      %s39 = scalar_select %p36, %s38, %s29
      %p40 = scmp.ge.s32.totalorder %s39, 2
      %s41 = scalar_select %p40, 0, %s39
      %s42 = ssub.s32 %s29, %s41
      %s43 = ssub.s32 %s30, %s37
      %s44 = sor.u32 %s42, %s43
      %p45 = scmp.eq.s32.totalorder %s44, 0
      %s47 = sadd.s32 %s46, 1
      %s48 = scalar_select %p45, %s46, %s47
      %p51 = pneg %p45
      %p52 = scmp.eq.s32.totalorder %s22, 1
      %p53 = por %p51, %p52
      %p54 = scmp.ne.s32.totalorder %s46, %s49
      %p55 = scmp.eq.s32.totalorder %s22, 0
      %p56 = por %p54, %p55
      %p57 = scmp.ne.s32.totalorder %s46, %s49
      %p58 = scmp.eq.s32.totalorder %s27, 1
      %p59 = por %p57, %p58
      %p60 = scmp.ne.s32.totalorder %s49, %s50
      %p61 = scmp.eq.s32.totalorder %s27, 0
      %p62 = por %p60, %p61
      %p63 = scmp.ne.s32.totalorder %s49, %s50
      %p64 = scmp.eq.s32.totalorder %s28, 1
      %p65 = por %p63, %p64
      %p67 = scmp.ne.s32.totalorder %s50, %s66
      %p68 = scmp.eq.s32.totalorder %s28, 0
      %p69 = por %p67, %p68
      %s70 = ssub.s32 %s29, %s41
      %s71 = ssub.s32 %s30, %s37
      %s72 = sor.u32 %s70, %s71
      %p73 = scmp.eq.s32.totalorder %s72, 0
      %s75 = sadd.s32 %s74, 1
      %s76 = scalar_select %p73, %s74, %s75
      %p79 = pneg %p73
      %p80 = scmp.eq.s32.totalorder %s22, 1
      %p81 = por %p79, %p80
      %p82 = scmp.ne.s32.totalorder %s74, %s77
      %p83 = scmp.eq.s32.totalorder %s22, 0
      %p84 = por %p82, %p83
      %p85 = scmp.ne.s32.totalorder %s74, %s77
      %p86 = scmp.eq.s32.totalorder %s27, 1
      %p87 = por %p85, %p86
      %p88 = scmp.ne.s32.totalorder %s77, %s78
      %p89 = scmp.eq.s32.totalorder %s27, 0
      %p90 = por %p88, %p89
      %p91 = scmp.ne.s32.totalorder %s77, %s78
      %p92 = scmp.eq.s32.totalorder %s28, 1
      %p93 = por %p91, %p92
      %p95 = scmp.ne.s32.totalorder %s78, %s94
      %p96 = scmp.eq.s32.totalorder %s28, 0
      %p97 = por %p95, %p96
      %s98 = ssub.s32 %s29, %s41
      %p99 = scmp.eq.s32.totalorder %s98, 0
      %s101 = sadd.s32 %s100, 1
      %s102 = scalar_select %p99, %s100, %s101
      %p105 = pneg %p99
      %p106 = scmp.eq.s32.totalorder %s22, 1
      %p107 = por %p105, %p106
      %p108 = scmp.ne.s32.totalorder %s100, %s103
      %p109 = scmp.eq.s32.totalorder %s22, 0
      %p110 = por %p108, %p109
      %p111 = scmp.ne.s32.totalorder %s100, %s103
      %p112 = scmp.eq.s32.totalorder %s27, 1
      %p113 = por %p111, %p112
      %p114 = scmp.ne.s32.totalorder %s103, %s104
      %p115 = scmp.eq.s32.totalorder %s27, 0
      %p116 = por %p114, %p115
      %p117 = scmp.ne.s32.totalorder %s103, %s104
      %p118 = scmp.eq.s32.totalorder %s28, 1
      %p119 = por %p117, %p118
      %p121 = scmp.ne.s32.totalorder %s104, %s120
      %p122 = scmp.eq.s32.totalorder %s28, 0
      %p123 = por %p121, %p122
      %s124 = ssub.s32 %s29, %s41
      %p125 = scmp.eq.s32.totalorder %s124, 0
      %s127 = sadd.s32 %s126, 1
      %s128 = scalar_select %p125, %s126, %s127
      %p131 = pneg %p125
      %p132 = scmp.eq.s32.totalorder %s22, 1
      %p133 = por %p131, %p132
      %p134 = scmp.ne.s32.totalorder %s126, %s129
      %p135 = scmp.eq.s32.totalorder %s22, 0
      %p136 = por %p134, %p135
      %p137 = scmp.ne.s32.totalorder %s126, %s129
      %p138 = scmp.eq.s32.totalorder %s27, 1
      %p139 = por %p137, %p138
      %p140 = scmp.ne.s32.totalorder %s129, %s130
      %p141 = scmp.eq.s32.totalorder %s27, 0
      %p142 = por %p140, %p141
      %p143 = scmp.ne.s32.totalorder %s129, %s130
      %p144 = scmp.eq.s32.totalorder %s28, 1
      %p145 = por %p143, %p144
      %p147 = scmp.ne.s32.totalorder %s130, %s146
      %p148 = scmp.eq.s32.totalorder %s28, 0
      %p149 = por %p147, %p148
      %p150 = scmp.le.s32.totalorder 1, %s22
      %p151 = scmp.lt.s32.totalorder %s22, 3
      %p152 = pnand %p150, %p151
      %p153 = pneg %p152
      // Predicated region
      $region9: #{tpu_custom_call.1} parent=5 // pred_check
        _
      $region10: #{tpu_custom_call.1} parent=5 // pred_check_branch
        %155 = sbr.rel (%p152) target = $region12
      $region11: #{tpu_custom_call.1} parent=5 // pred_region
        %s156 = ssub.s32 %s22, 1
      $region12: #{tpu_custom_call.1} parent=5 // pred_fallthru
        _
      %p157 = scmp.lt.s32.totalorder %s22, 2
      // Predicated region
      $region13: #{tpu_custom_call.1} parent=5 // pred_check
        %p158 = pneg %p157
      $region14: #{tpu_custom_call.1} parent=5 // pred_check_branch
        %160 = sbr.rel (%p158) target = $region16
      $region15: #{tpu_custom_call.1} parent=5 // pred_region
        // Predicated region
        $region17: #{tpu_custom_call.1} parent=15 // pred_check
          %p161 = pneg %p56
        $region18: #{tpu_custom_call.1} parent=15 // pred_check_branch
          %163 = sbr.rel (%p161) target = $region20
        $region19: #{tpu_custom_call.1} parent=15 // pred_region
          %s164 = sand.u32 %s46, 1
          %s165 = scalar_lea.sflag [#allocation3], %s164
          %s166 = sand.u32 %s46, 1
          %s167 = smul.addr %s166, 2
          %s168 = scalar_lea.vmem [#allocation2], %s167
          %s170 = ssub.s32 32, 32
          %171 = vsyncadd %s165, %s170
          %s172 = smul.addr %s29, 4
          %s173 = sadd.s32 %s30, %s172
          %s174 = smul.addr %s173, 32
          %s175 = scalar_lea.hbm %s0, %s174
          %s177 = sshll.u32 %s168, 4
          %s178 = int_to_ptr.vmem [resolvable:$true] %s177
          %180 = dma.hbm_to_vmem [thread:$0]  %s175, 32, %s178, %s165
        $region20: #{tpu_custom_call.1} parent=15 // pred_fallthru
          _
        // Predicated region
        $region21: #{tpu_custom_call.1} parent=15 // pred_check
          %p181 = pneg %p84
        $region22: #{tpu_custom_call.1} parent=15 // pred_check_branch
          %183 = sbr.rel (%p181) target = $region24
        $region23: #{tpu_custom_call.1} parent=15 // pred_region
          %s184 = sand.u32 %s74, 1
          %s185 = scalar_lea.sflag [#allocation6], %s184
          %s186 = sand.u32 %s74, 1
          %s187 = smul.addr %s186, 2
          %s188 = scalar_lea.vmem [#allocation5], %s187
          %s190 = ssub.s32 32, 32
          %191 = vsyncadd %s185, %s190
          %s192 = smul.addr %s29, 4
          %s193 = sadd.s32 %s30, %s192
          %s194 = smul.addr %s193, 32
          %s195 = scalar_lea.hbm %s1, %s194
          %s197 = sshll.u32 %s188, 4
          %s198 = int_to_ptr.vmem [resolvable:$true] %s197
          %200 = dma.hbm_to_vmem [thread:$0]  %s195, 32, %s198, %s185
        $region24: #{tpu_custom_call.1} parent=15 // pred_fallthru
          _
      $region16: #{tpu_custom_call.1} parent=5 // pred_fallthru
        _
      %p201 = scmp.le.s32.totalorder 1, %s22
      %p202 = scmp.lt.s32.totalorder %s22, 3
      %p203 = pnand %p201, %p202
      %p204 = pneg %p203
      // Predicated region
      $region25: #{tpu_custom_call.1} parent=5 // pred_check
        _
      $region26: #{tpu_custom_call.1} parent=5 // pred_check_branch
        %206 = sbr.rel (%p203) target = $region28
      $region27: #{tpu_custom_call.1} parent=5 // pred_region
        %s207 = ssub.s32 %s22, 1
        %s208 = sand.u32 %s49, 1
        %s209 = scalar_lea.sflag [#allocation3], %s208
        %s210 = sand.u32 %s49, 1
        %s211 = smul.addr %s210, 2
        %s212 = scalar_lea.vmem [#allocation2], %s211
        // Predicated region
        $region29: #{tpu_custom_call.1} parent=27 // pred_check
          %p213 = pneg %p62
        $region30: #{tpu_custom_call.1} parent=27 // pred_check_branch
          %215 = sbr.rel (%p213) target = $region32
        $region31: #{tpu_custom_call.1} parent=27 // pred_region
          %216 = dma.done %s209, 32
        $region32: #{tpu_custom_call.1} parent=27 // pred_fallthru
          _
        %s217 = sand.u32 %s77, 1
        %s218 = scalar_lea.sflag [#allocation6], %s217
        %s219 = sand.u32 %s77, 1
        %s220 = smul.addr %s219, 2
        %s221 = scalar_lea.vmem [#allocation5], %s220
        // Predicated region
        $region33: #{tpu_custom_call.1} parent=27 // pred_check
          %p222 = pneg %p90
        $region34: #{tpu_custom_call.1} parent=27 // pred_check_branch
          %224 = sbr.rel (%p222) target = $region36
        $region35: #{tpu_custom_call.1} parent=27 // pred_region
          %225 = dma.done %s218, 32
        $region36: #{tpu_custom_call.1} parent=27 // pred_fallthru
          _
        %s226 = sand.u32 %s49, 1
        %s227 = scalar_lea.sflag [#allocation3], %s226
        %s228 = sand.u32 %s49, 1
        %s229 = smul.addr %s228, 2
        %s230 = scalar_lea.vmem [#allocation2], %s229
        %p231 = pneg %p62
        %p232 = pneg %p59
        %s233 = sand.u32 %s77, 1
        %s234 = scalar_lea.sflag [#allocation6], %s233
        %s235 = sand.u32 %s77, 1
        %s236 = smul.addr %s235, 2
        %s237 = scalar_lea.vmem [#allocation5], %s236
        %p238 = pneg %p90
        %p239 = pneg %p87
        %p240 = pneg %p116
        %p241 = pneg %p113
        %s242 = sand.u32 %s103, 1
        %s243 = scalar_lea.sflag [#allocation4], %s242
        %s244 = sand.u32 %s103, 1
        %s245 = scalar_lea.vmem [#allocation7], %s244
        %p246 = pneg %p142
        %p247 = pneg %p139
        %s248 = sand.u32 %s129, 1
        %s249 = scalar_lea.sflag [#allocation9], %s248
        %s250 = sand.u32 %s129, 1
        %s251 = scalar_lea.vmem [#allocation8], %s250
        %p252 = scmp.eq.s32.totalorder %s32, 0
        // Predicated region
        $region37: #{tpu_custom_call.1} parent=27 // pred_check
          %p253 = pneg %p252
        $region38: #{tpu_custom_call.1} parent=27 // pred_check_branch
          %255 = sbr.rel (%p253) target = $region40
        $region39: #{tpu_custom_call.1} parent=27 // pred_region
          %256 = vst [vmem:[%s245] sm:$0x1] 0.0
          %257 = vst [vmem:[%s251] sm:$0x1] 0.0
        $region40: #{tpu_custom_call.1} parent=27 // pred_fallthru
          _
        %v258 = vld [vmem:[%s212] sm:$0x3]
        %v259 = vld [vmem:[%s221] sm:$0x3]
        %v260 = vld [vmem:[%s245] sm:$0x1]
        %v261 = vmul.f32 %v258, %v259
        %vm262 = vcmask 1041408
        %v263 = vsel %vm262, %v261, 0.0
        %v264 = vrot.slane %v263, 4
        %v265 = vadd.f32 %v263, %v264
        %v266 = vrot.slane %v265, 2
        %v267 = vadd.f32 %v265, %v266
        %v268 = vrot.slane %v267, 1
        %v269 = vadd.f32 %v267, %v268
        %v270 = vadd.f32 %v260, %v269
        %271 = vst [vmem:[%s245] sm:$0x1] %v270
        %v272 = vld [vmem:[%s251] sm:$0x1]
        %v273 = vsel %vm262, %v258, 0.0
        %v274 = vrot.slane %v273, 4
        %v275 = vadd.f32 %v273, %v274
        %v276 = vrot.slane %v275, 2
        %v277 = vadd.f32 %v275, %v276
        %v278 = vrot.slane %v277, 1
        %v279 = vadd.f32 %v277, %v278
        %v280 = vsel %vm262, %v259, 0.0
        %v281 = vrot.slane %v280, 4
        %v282 = vadd.f32 %v280, %v281
        %v283 = vrot.slane %v282, 2
        %v284 = vadd.f32 %v282, %v283
        %v285 = vrot.slane %v284, 1
        %v286 = vadd.f32 %v284, %v285
        %v287 = vadd.f32 %v279, %v286
        %v288 = vadd.f32 %v272, %v287
        %289 = vst [vmem:[%s251] sm:$0x1] %v288
        %s290 = sand.u32 %s103, 1
        %s291 = scalar_lea.sflag [#allocation4], %s290
        %s292 = sand.u32 %s103, 1
        %s293 = scalar_lea.vmem [#allocation7], %s292
        %s294 = sand.u32 %s129, 1
        %s295 = scalar_lea.sflag [#allocation9], %s294
        %s296 = sand.u32 %s129, 1
        %s297 = scalar_lea.vmem [#allocation8], %s296
        // Predicated region
        $region41: #{tpu_custom_call.1} parent=27 // pred_check
          %p298 = pneg %p113
        $region42: #{tpu_custom_call.1} parent=27 // pred_check_branch
          %300 = sbr.rel (%p298) target = $region44
        $region43: #{tpu_custom_call.1} parent=27 // pred_region
          %s302 = ssub.s32 16, 16
          %303 = vsyncadd %s291, %s302
          %s304 = smul.addr %s31, 16
          %s305 = scalar_lea.hbm %s2, %s304
          %s307 = sshll.u32 %s293, 4
          %s308 = int_to_ptr.vmem [resolvable:$true] %s307
          %310 = dma.vmem_to_hbm [thread:$0]  %s308, 16, %s305, %s291
        $region44: #{tpu_custom_call.1} parent=27 // pred_fallthru
          _
        // Predicated region
        $region45: #{tpu_custom_call.1} parent=27 // pred_check
          %p311 = pneg %p139
        $region46: #{tpu_custom_call.1} parent=27 // pred_check_branch
          %313 = sbr.rel (%p311) target = $region48
        $region47: #{tpu_custom_call.1} parent=27 // pred_region
          %s315 = ssub.s32 16, 16
          %316 = vsyncadd %s295, %s315
          %s317 = smul.addr %s31, 16
          %s318 = scalar_lea.hbm %s3, %s317
          %s320 = sshll.u32 %s297, 4
          %s321 = int_to_ptr.vmem [resolvable:$true] %s320
          %323 = dma.vmem_to_hbm [thread:$0]  %s321, 16, %s318, %s295
        $region48: #{tpu_custom_call.1} parent=27 // pred_fallthru
          _
      $region28: #{tpu_custom_call.1} parent=5 // pred_fallthru
        _
      %p324 = scmp.le.s32.totalorder 2, %s22
      // Predicated region
      $region49: #{tpu_custom_call.1} parent=5 // pred_check
        %p325 = pneg %p324
      $region50: #{tpu_custom_call.1} parent=5 // pred_check_branch
        %327 = sbr.rel (%p325) target = $region52
      $region51: #{tpu_custom_call.1} parent=5 // pred_region
        %s328 = ssub.s32 %s22, 2
        // Predicated region
        $region53: #{tpu_custom_call.1} parent=51 // pred_check
          %p329 = pneg %p119
        $region54: #{tpu_custom_call.1} parent=51 // pred_check_branch
          %331 = sbr.rel (%p329) target = $region56
        $region55: #{tpu_custom_call.1} parent=51 // pred_region
          %s332 = sand.u32 %s104, 1
          %s333 = scalar_lea.sflag [#allocation4], %s332
          %s334 = sand.u32 %s104, 1
          %s335 = scalar_lea.vmem [#allocation7], %s334
          %336 = dma.done %s333, 16
        $region56: #{tpu_custom_call.1} parent=51 // pred_fallthru
          _
        // Predicated region
        $region57: #{tpu_custom_call.1} parent=51 // pred_check
          %p337 = pneg %p145
        $region58: #{tpu_custom_call.1} parent=51 // pred_check_branch
          %339 = sbr.rel (%p337) target = $region60
        $region59: #{tpu_custom_call.1} parent=51 // pred_region
          %s340 = sand.u32 %s130, 1
          %s341 = scalar_lea.sflag [#allocation9], %s340
          %s342 = sand.u32 %s130, 1
          %s343 = scalar_lea.vmem [#allocation8], %s342
          %344 = dma.done %s341, 16
        $region60: #{tpu_custom_call.1} parent=51 // pred_fallthru
          _
      $region52: #{tpu_custom_call.1} parent=5 // pred_fallthru
        _
    $region6: #{tpu_custom_call.1} parent=1 // loop_footer
      %s26 = sadd.s32 1, %s22
    $region7: #{tpu_custom_call.1} parent=1 // loop_footer_branch
      %21 = sbr.rel target = $region3
    $region8: #{tpu_custom_call.1} parent=1 // loop_exit
      _
    %345 = vsyncpa [#allocation3], 1
    %s346 = scalar_lea.sflag [#allocation3], 1
    %347 = vsyncpa %s346, 1
    %348 = vsyncpa [#allocation6], 1
    %s349 = scalar_lea.sflag [#allocation6], 1
    %350 = vsyncpa %s349, 1
    %351 = vsyncpa [#allocation4], 1
    %s352 = scalar_lea.sflag [#allocation4], 1
    %353 = vsyncpa %s352, 1
    %354 = vsyncpa [#allocation9], 1
    %s355 = scalar_lea.sflag [#allocation9], 1
    %356 = vsyncpa %s355, 1

</llo_original>
